<compile_context>
chip_gen: v7x
topology: tpu7x:2x2x1
jax: 0.10.0
libtpu: 0.0.40
codegen_flags: <defaults>
</compile_context>

<pallas_src>
import functools

import jax
import jax.numpy as jnp
from jax.experimental import pallas as pl
from jax.experimental.pallas import tpu as pltpu

_LANES = 128
_MAX_BLOCK_ROWS = 512          # (512, 128) f32 = 256 KiB per block -> safe on v5e/v6e/v7x
_EPS_MAX = 1e-8
_CLAMP_MIN = 1e-6
_CLAMP_MAX = 1.0


def _bandstop_kernel(p_ref, x_ref, o_ref):
    """p_ref: SMEM (9,) f32 =
         [inv_max, low_g, high_g, stop_d, 1-stop_d, scale, center, norm_low, norm_high]
       x_ref / o_ref: VMEM (block_rows, 128) f32 eigenvalue tile / filter response tile."""
    inv_max = p_ref[0]
    low_g = p_ref[1]
    high_g = p_ref[2]
    stop_d = p_ref[3]
    one_minus_d = p_ref[4]
    scale = p_ref[5]
    center = p_ref[6]
    norm_low = p_ref[7]
    norm_high = p_ref[8]

    # Normalize with a scalar reciprocal computed once in the wrapper.
    ne = x_ref[...] * inv_max

    # Stop-band response: stop_d + (1-stop_d) * exp(-scale * (ne - center)^2)
    t = ne - center
    stop_resp = stop_d + one_minus_d * jnp.exp(-scale * (t * t))

    # Pass-band response as nested selects against scalars (no ones-tile,
    # no full-tile gain multiplies).  Branches are mutually exclusive.
    resp = jnp.where(ne < norm_low, low_g,
                     jnp.where(ne > norm_high, high_g, jnp.float32(1.0)))
    in_band = jnp.logical_and(ne >= norm_low, ne <= norm_high)
    resp = jnp.where(in_band, stop_resp, resp)

    o_ref[...] = jnp.clip(resp, _CLAMP_MIN, _CLAMP_MAX)


@jax.jit
def band_stop_spectral_filter(eigenvalues, params):
    """params: dict of the 6 raw (pre-sigmoid) learned scalars, like the nn.Module."""
    eigenvalues = eigenvalues.astype(jnp.float32)
    n = eigenvalues.shape[0]

    # --- scalar parameter transforms (glue, plain JAX) ---
    low_cut = jax.nn.sigmoid(params["low_cutoff"]) * 0.8
    high_cut = low_cut + jax.nn.sigmoid(params["high_cutoff"]) * (2.0 - low_cut)
    low_g = jax.nn.sigmoid(params["low_gain"])
    high_g = jax.nn.sigmoid(params["high_gain"])
    stop_d = jax.nn.sigmoid(params["stop_depth"]) * 0.2
    sharpness = jnp.abs(params["transition_sharpness"]) + 1.0
    norm_low = low_cut * 0.5
    norm_high = high_cut * 0.5
    center = (norm_low + norm_high) * 0.5
    # Clamp width so precomputing scale cannot create a *new* nan path;
    # with non-degenerate params this is exactly sharpness / width**2.
    width = jnp.maximum((norm_high - norm_low) * 0.5, 1e-12)
    scale = sharpness / (width * width)

    # Global max hoisted out of the kernel (one cheap near-roofline pass).
    inv_max = 1.0 / (jnp.max(eigenvalues) + _EPS_MAX)

    p = jnp.stack(
        [inv_max, low_g, high_g, stop_d, 1.0 - stop_d, scale, center,
         norm_low, norm_high]
    ).astype(jnp.float32)

    # --- lane-dense (rows, 128) slab, tiled over a parallel row grid ---
    rows = -(-n // _LANES)
    if rows >= _MAX_BLOCK_ROWS:
        block_rows = _MAX_BLOCK_ROWS
    else:
        block_rows = ((rows + 7) // 8) * 8          # at least one (8,128) tile
    rows_pad = -(-rows // block_rows) * block_rows
    n_pad = rows_pad * _LANES
    num_blocks = rows_pad // block_rows

    # Zero padding is safe: the max was taken on the original vector and the
    # padded tail of the output is discarded below.
    # TODO(synk): for very large N, mask the tail in-kernel instead of padding
    # to avoid the extra HBM pass jnp.pad implies.
    x2d = jnp.pad(eigenvalues, (0, n_pad - n)).reshape(rows_pad, _LANES)

    out2d = pl.pallas_call(
        _bandstop_kernel,
        out_shape=jax.ShapeDtypeStruct((rows_pad, _LANES), jnp.float32),
        grid_spec=pl.GridSpec(
            grid=(num_blocks,),
            in_specs=[
                pl.BlockSpec(memory_space=pltpu.MemorySpace.SMEM),
                pl.BlockSpec((block_rows, _LANES), lambda i: (i, 0)),
            ],
            out_specs=pl.BlockSpec((block_rows, _LANES), lambda i: (i, 0)),
        ),
        compiler_params=pltpu.CompilerParams(
            dimension_semantics=("parallel",)
        ),
    )(p, x2d)

    return out2d.reshape(-1)[:n]


def _reference(eigenvalues, params):
    """Pure-JAX reference mirroring the PyTorch forward."""
    low_cut = jax.nn.sigmoid(params["low_cutoff"]) * 0.8
    high_cut = low_cut + jax.nn.sigmoid(params["high_cutoff"]) * (2.0 - low_cut)
    low_g = jax.nn.sigmoid(params["low_gain"])
    high_g = jax.nn.sigmoid(params["high_gain"])
    stop_d = jax.nn.sigmoid(params["stop_depth"]) * 0.2
    sharpness = jnp.abs(params["transition_sharpness"]) + 1.0
    max_eig = jnp.max(eigenvalues) + 1e-8
    ne = eigenvalues / max_eig
    nl, nh = low_cut / 2.0, high_cut / 2.0
    resp = jnp.ones_like(ne)
    resp = jnp.where(ne < nl, low_g * resp, resp)
    resp = jnp.where(ne > nh, high_g * resp, resp)
    mask = (ne >= nl) & (ne <= nh)
    c = (nl + nh) / 2
    w = (nh - nl) / 2
    sr = stop_d + (1 - stop_d) * jnp.exp(-sharpness * ((ne - c) / w) ** 2)
    resp = jnp.where(mask, sr, resp)
    return jnp.clip(resp, 1e-6, 1.0)


if __name__ == "__main__":
    # Deterministic parameter init matching the nn.Module __init__ values.
    params = {
        "low_cutoff": jnp.float32(0.2),
        "high_cutoff": jnp.float32(1.0),
        "low_gain": jnp.float32(1.0),
        "high_gain": jnp.float32(0.8),
        "stop_depth": jnp.float32(0.05),
        "transition_sharpness": jnp.float32(5.0),
    }

    key = jax.random.PRNGKey(0)
    # Small spectrum of non-negative eigenvalues (e.g. graph Laplacian).
    eigenvalues = jax.random.uniform(key, (1024,), minval=0.0, maxval=2.0,
                                     dtype=jnp.float32)

    out = band_stop_spectral_filter(eigenvalues, params)
    out = jax.block_until_ready(out)

    ref = _reference(eigenvalues, params)
    assert out.shape == eigenvalues.shape
    assert jnp.allclose(out, ref, atol=1e-5, rtol=1e-5), "mismatch vs reference"

    print("KERNEL_OK")
</pallas_src>

<mosaic_0001>
module attributes {stable_mosaic.version = 11 : i64} {
  func.func @_bandstop_kernel(%arg0: i32, %arg1: memref<9xf32, #tpu.memory_space<smem>>, %arg2: memref<8x128xf32, #tpu.memory_space<vmem>>, %arg3: memref<8x128xf32, #tpu.memory_space<vmem>>) attributes {dimension_semantics = [#tpu.dimension_semantics<parallel>], iteration_bounds = array<i64: 1>, scalar_prefetch = 0 : i64, scratch_operands = 0 : i64, tpu.core_type = #tpu.core_type<tc>, window_params = [{transform_indices = @transform_0, window_bounds = array<i64: 9>}, {transform_indices = @transform_1, window_bounds = array<i64: 8, 128>}, {transform_indices = @transform_2, window_bounds = array<i64: 8, 128>}]} {
    %c0 = arith.constant 0 : index
    %0 = memref.load %arg1[%c0] : memref<9xf32, #tpu.memory_space<smem>>
    %c1 = arith.constant 1 : index
    %1 = memref.load %arg1[%c1] : memref<9xf32, #tpu.memory_space<smem>>
    %c2 = arith.constant 2 : index
    %2 = memref.load %arg1[%c2] : memref<9xf32, #tpu.memory_space<smem>>
    %c3 = arith.constant 3 : index
    %3 = memref.load %arg1[%c3] : memref<9xf32, #tpu.memory_space<smem>>
    %c4 = arith.constant 4 : index
    %4 = memref.load %arg1[%c4] : memref<9xf32, #tpu.memory_space<smem>>
    %c5 = arith.constant 5 : index
    %5 = memref.load %arg1[%c5] : memref<9xf32, #tpu.memory_space<smem>>
    %c6 = arith.constant 6 : index
    %6 = memref.load %arg1[%c6] : memref<9xf32, #tpu.memory_space<smem>>
    %c7 = arith.constant 7 : index
    %7 = memref.load %arg1[%c7] : memref<9xf32, #tpu.memory_space<smem>>
    %c8 = arith.constant 8 : index
    %8 = memref.load %arg1[%c8] : memref<9xf32, #tpu.memory_space<smem>>
    %c0_0 = arith.constant 0 : index
    %c0_1 = arith.constant 0 : index
    %9 = vector.load %arg2[%c0_0, %c0_1] : memref<8x128xf32, #tpu.memory_space<vmem>>, vector<8x128xf32>
    %10 = vector.broadcast %0 : f32 to vector<8x128xf32>
    %11 = arith.mulf %9, %10 : vector<8x128xf32>
    %12 = vector.broadcast %6 : f32 to vector<8x128xf32>
    %13 = arith.subf %11, %12 : vector<8x128xf32>
    %cst = arith.constant 0.000000e+00 : f32
    %14 = arith.subf %cst, %5 : f32
    %15 = arith.mulf %13, %13 : vector<8x128xf32>
    %16 = vector.broadcast %14 : f32 to vector<8x128xf32>
    %17 = arith.mulf %16, %15 : vector<8x128xf32>
    %18 = math.exp %17 : vector<8x128xf32>
    %19 = vector.broadcast %4 : f32 to vector<8x128xf32>
    %20 = arith.mulf %19, %18 : vector<8x128xf32>
    %21 = vector.broadcast %3 : f32 to vector<8x128xf32>
    %22 = arith.addf %21, %20 : vector<8x128xf32>
    %23 = vector.broadcast %7 : f32 to vector<8x128xf32>
    %24 = arith.cmpf olt, %11, %23 : vector<8x128xf32>
    %25 = vector.broadcast %8 : f32 to vector<8x128xf32>
    %26 = arith.cmpf ogt, %11, %25 : vector<8x128xf32>
    %cst_2 = arith.constant 1.000000e+00 : f32
    %27 = vector.broadcast %2 : f32 to vector<8x128xf32>
    %28 = vector.broadcast %cst_2 : f32 to vector<8x128xf32>
    %29 = arith.select %26, %27, %28 : vector<8x128xi1>, vector<8x128xf32>
    %30 = vector.broadcast %1 : f32 to vector<8x128xf32>
    %31 = arith.select %24, %30, %29 : vector<8x128xi1>, vector<8x128xf32>
    %32 = vector.broadcast %7 : f32 to vector<8x128xf32>
    %33 = arith.cmpf oge, %11, %32 : vector<8x128xf32>
    %34 = vector.broadcast %8 : f32 to vector<8x128xf32>
    %35 = arith.cmpf ole, %11, %34 : vector<8x128xf32>
    %36 = arith.andi %33, %35 : vector<8x128xi1>
    %37 = arith.select %36, %22, %31 : vector<8x128xi1>, vector<8x128xf32>
    %cst_3 = arith.constant 9.99999997E-7 : f32
    %cst_4 = arith.constant 1.000000e+00 : f32
    %38 = vector.broadcast %cst_3 : f32 to vector<8x128xf32>
    %39 = arith.maximumf %38, %37 : vector<8x128xf32>
    %40 = vector.broadcast %cst_4 : f32 to vector<8x128xf32>
    %41 = arith.minimumf %40, %39 : vector<8x128xf32>
    %c0_5 = arith.constant 0 : index
    %c0_6 = arith.constant 0 : index
    %42 = vector.load %arg3[%c0_5, %c0_6] : memref<8x128xf32, #tpu.memory_space<vmem>>, vector<8x128xf32>
    tpu.vector_store %arg3[%c0_5, %c0_6], %41 {strides = array<i32>} : memref<8x128xf32, #tpu.memory_space<vmem>>, vector<8x128xf32>,
    return
  }
  func.func @transform_0(%arg0: i32) -> i32 {
    %c0_i32 = arith.constant 0 : i32
    %c0_i32_0 = arith.constant 0 : i32
    return %c0_i32 : i32
  }
  func.func @transform_1(%arg0: i32) -> (i32, i32) {
    %c0_i32 = arith.constant 0 : i32
    %c0_i32_0 = arith.constant 0 : i32
    return %arg0, %c0_i32 : i32, i32
  }
  func.func @transform_2(%arg0: i32) -> (i32, i32) {
    %c0_i32 = arith.constant 0 : i32
    %c0_i32_0 = arith.constant 0 : i32
    return %arg0, %c0_i32 : i32, i32
  }
}

</mosaic_0001>

<llo_original>
// kernel: band_stop_spectral_filter.1
$region0: #{band_stop_spectral_filter.1}
  #allocation0 [shape = 'u32[]', space=smem, size = 0x4, offset = 0x4, fixed_abs, tag = 'smem constant byte address 0x4 - core index']
  #allocation1 [shape = 'u32[144,128]{1,0:T(1,128)}', space=vmem, size = 0x12000, scoped, tag = 'internal scratch']
  %s0 = inlined_call_operand.vmem [shape: f32[9], index: 0, kind: input, shape index: {}]
  %s1 = inlined_call_operand.vmem [shape: f32[8,128], index: 1, kind: input, shape index: {}]
  %s2 = inlined_call_operand.hbm [shape: f32[8,128], index: 2, kind: output, shape index: {}]
  %s3 = sld [smem:[#allocation0]]
  $region22: #{band_stop_spectral_filter.1} parent=0
    _
  %s5 = ssub.s32 1, %s3
  %s6 = scalar_select 0, %s5, %s3
  $region1: #{band_stop_spectral_filter.1} parent=0
    #allocation2 [shape = 'u8[512]{0}', space=smem, size = 0x200, scoped, tag = 'input window, operand 0, single buffered']
    #allocation3 [shape = 's32[1]{0}', space=sflag, size = 0x4, scoped, tag = 'scoped memory for band_stop_spectral_filter.1']
    #allocation4 [shape = 's32[1]{0}', space=sflag, size = 0x4, scoped, tag = 'scoped memory for band_stop_spectral_filter.1']
    #allocation5 [shape = 'u8[4096]{0}', space=vmem, size = 0x1000, scoped, tag = 'output window, operand 0, single buffered']
    %7 = vsyncpa [#allocation4], 0
    %8 = vsyncpa [#allocation3], 0
    // Predicated region
    $region2: #{band_stop_spectral_filter.1} parent=1 // pred_check
      _
    $region3: #{band_stop_spectral_filter.1} parent=1 // pred_check_branch
      %10 = sbr.rel (0) target = $region5
    $region4: #{band_stop_spectral_filter.1} parent=1 // pred_region
      %s12 = ssub.s32 16, 16
      %13 = vsyncadd [#allocation4], %s12
      %s15 = sshll.u32 %s0, 4
      %s16 = int_to_ptr.vmem [resolvable:$true] %s15
      %18 = dma.vmem_to_smem %s16, 16, [#allocation2], [#allocation4]
    $region5: #{band_stop_spectral_filter.1} parent=1 // pred_fallthru
      _
    // Predicated region
    $region6: #{band_stop_spectral_filter.1} parent=1 // pred_check
      _
    $region7: #{band_stop_spectral_filter.1} parent=1 // pred_check_branch
      %20 = sbr.rel (0) target = $region9
    $region8: #{band_stop_spectral_filter.1} parent=1 // pred_region
      _
    $region9: #{band_stop_spectral_filter.1} parent=1 // pred_fallthru
      _
    // Predicated region
    $region10: #{band_stop_spectral_filter.1} parent=1 // pred_check
      _
    $region11: #{band_stop_spectral_filter.1} parent=1 // pred_check_branch
      %22 = sbr.rel (0) target = $region13
    $region12: #{band_stop_spectral_filter.1} parent=1 // pred_region
      %23 = dma.done [#allocation4], 16
    $region13: #{band_stop_spectral_filter.1} parent=1 // pred_fallthru
      _
    %24 = sfence
    %s25 = sld [smem:[#allocation2]]
    %s26 = sld [smem:[#allocation2 + $0x1]]
    %s27 = sld [smem:[#allocation2 + $0x2]]
    %s28 = sld [smem:[#allocation2 + $0x3]]
    %s29 = sld [smem:[#allocation2 + $0x4]]
    %s30 = sld [smem:[#allocation2 + $0x5]]
    %s31 = sld [smem:[#allocation2 + $0x6]]
    %s32 = sld [smem:[#allocation2 + $0x7]]
    %s33 = sld [smem:[#allocation2 + $0x8]]
    %v34 = vld [vmem:[%s1] sm:$0xff]
    %v35 = vstv %s25
    %v36 = vmul.f32 %v34, %v35
    %v37 = vstv %s31
    %v38 = vsub.f32 %v36, %v37
    %s39 = ssub.f32 0.0, %s30
    %v40 = vmul.f32 %v38, %v38
    %v41 = vstv %s39
    %v42 = vmul.f32 %v41, %v40
    %v43 = vmul.f32 %v42, 1.442695
    %v44 = vpow.pop %v43
    %v45 = vstv %s29
    %v46 = vmul.f32 %v45, %v44
    %v47 = vstv %s28
    %v48 = vadd.f32 %v47, %v46
    %v49 = vstv %s32
    %vm50 = vcmp.lt.f32.partialorder %v36, %v49
    %v51 = vstv %s33
    %vm52 = vcmp.gt.f32.partialorder %v36, %v51
    %v53 = vstv %s27
    %v54 = vsel %vm52, %v53, 1.0
    %v55 = vstv %s26
    %v56 = vsel %vm50, %v55, %v54
    %vm57 = vcmp.ge.f32.partialorder %v36, %v49
    %vm58 = vcmp.le.f32.partialorder %v36, %v51
    %vm59 = vmand %vm57, %vm58
    %v60 = vsel %vm59, %v48, %v56
    %v61 = vmax.f32 %v60, 1e-06
    %v62 = vmin.f32 %v61, 1.0
    %63 = vst [vmem:[#allocation5] sm:$0xff] %v62
    // Predicated region
    $region14: #{band_stop_spectral_filter.1} parent=1 // pred_check
      _
    $region15: #{band_stop_spectral_filter.1} parent=1 // pred_check_branch
      %65 = sbr.rel (0) target = $region17
    $region16: #{band_stop_spectral_filter.1} parent=1 // pred_region
      %s67 = ssub.s32 128, 128
      %68 = vsyncadd [#allocation3], %s67
      %s70 = sshll.u32 [#allocation5], 4
      %s71 = int_to_ptr.vmem [resolvable:$true] %s70
      %73 = dma.vmem_to_hbm [thread:$0]  %s71, 128, %s2, [#allocation3]
    $region17: #{band_stop_spectral_filter.1} parent=1 // pred_fallthru
      _
    // Predicated region
    $region18: #{band_stop_spectral_filter.1} parent=1 // pred_check
      _
    $region19: #{band_stop_spectral_filter.1} parent=1 // pred_check_branch
      %75 = sbr.rel (0) target = $region21
    $region20: #{band_stop_spectral_filter.1} parent=1 // pred_region
      %76 = dma.done [#allocation3], 128
    $region21: #{band_stop_spectral_filter.1} parent=1 // pred_fallthru
      _
    %77 = vsyncpa [#allocation3], 1
    %78 = vsyncpa [#allocation4], 1

</llo_original>
